<compile_context>
chip_gen: v7x
topology: tpu7x:2x2x1
jax: 0.10.0
libtpu: 0.0.40
codegen_flags: <defaults>
</compile_context>

<pallas_src>
import functools

import jax
import jax.numpy as jnp
from jax.experimental import pallas as pl
from jax.experimental.pallas import tpu as pltpu

IN_DIM = 1024
HID_DIM = 256
OUT_DIM = 2
OUT_PAD = 128          # lane-dense padded output width for layer 2
NEG_SLOPE = 0.01       # torch.nn.LeakyReLU default


def _round_up(x, m):
    return (x + m - 1) // m * m


def mlp_kernel(x_ref, w1_ref, b1_ref, w2_ref, b2_ref, o_ref, *, compute_dtype):
    # In-kernel f32 -> bf16 cast: cheap VPU work hidden under the DMA/matmul,
    # and the x tile is DMA'd from HBM exactly once (in f32).
    x = x_ref[...].astype(compute_dtype)
    # Layer 1: (TB, 1024) @ (1024, 256) on the MXU, f32 accumulation.
    h = jnp.dot(x, w1_ref[...], preferred_element_type=jnp.float32)
    h = h + b1_ref[...]                      # bias add in f32
    h = jnp.maximum(h, NEG_SLOPE * h)        # LeakyReLU: 1 mul + 1 max (VPU)
    # Layer 2: (TB, 256) @ (256, 128) -- N padded to 128 lanes (zeros beyond 2).
    out = jnp.dot(h.astype(w2_ref.dtype), w2_ref[...],
                  preferred_element_type=jnp.float32)
    out = out + b2_ref[...]
    o_ref[...] = out.astype(o_ref.dtype)


def prepare_params(w1, b1, w2, b2, compute_dtype=jnp.bfloat16):
    """One-time weight prep (cast / pad / reshape). Reuse across forward calls."""
    w1_c = w1.astype(compute_dtype)
    # Pad layer 2 to a lane-dense 128-wide output; padding columns are exactly 0.
    w2_c = jnp.pad(w2, ((0, 0), (0, OUT_PAD - OUT_DIM))).astype(compute_dtype)
    b1_row = b1.astype(jnp.float32).reshape(1, HID_DIM)
    b2_row = jnp.pad(b2.astype(jnp.float32),
                     (0, OUT_PAD - OUT_DIM)).reshape(1, OUT_PAD)
    return w1_c, b1_row, w2_c, b2_row


def _choose_tb(B, block_b):
    # >=2 roughly balanced blocks when possible (v7x megacore), capped by
    # block_b, rounded to 16 sublanes (fine for both f32 and bf16 tiling).
    half = _round_up(pl.cdiv(B, 2), 16)
    return max(16, min(block_b, half, _round_up(B, 16)))


def linear_mlp_forward(x, prepared_params, *, block_b=2048,
                       store_dtype=jnp.bfloat16):
    """forward(x) = Linear2(LeakyReLU(Linear1(x))).

    x: (B, 1024) f32. prepared_params from prepare_params() — weights stored as
    (in_features, out_features), i.e. the transpose of PyTorch's (out, in).
    """
    w1_c, b1_row, w2_c, b2_row = prepared_params
    compute_dtype = w1_c.dtype
    B = x.shape[0]

    TB = _choose_tb(B, block_b)
    grid = (pl.cdiv(B, TB),)     # partial last block OK: rows are independent

    bytes_accessed = (
        x.size * x.dtype.itemsize                                # f32 x read
        + w1_c.size * w1_c.dtype.itemsize
        + w2_c.size * w2_c.dtype.itemsize
        + b1_row.size * b1_row.dtype.itemsize
        + b2_row.size * b2_row.dtype.itemsize
        + B * OUT_PAD * jnp.dtype(store_dtype).itemsize          # padded store
    )
    cost = pl.CostEstimate(
        flops=2 * B * IN_DIM * HID_DIM + 2 * B * HID_DIM * OUT_PAD,
        transcendentals=0,
        bytes_accessed=bytes_accessed,
    )

    out_padded = pl.pallas_call(
        functools.partial(mlp_kernel, compute_dtype=compute_dtype),
        out_shape=jax.ShapeDtypeStruct((B, OUT_PAD), store_dtype),
        grid=grid,
        in_specs=[
            pl.BlockSpec((TB, IN_DIM), lambda i: (i, 0)),        # x tile (pipelined, f32)
            pl.BlockSpec((IN_DIM, HID_DIM), lambda i: (0, 0)),   # w1 resident
            pl.BlockSpec((1, HID_DIM), lambda i: (0, 0)),        # b1 resident
            pl.BlockSpec((HID_DIM, OUT_PAD), lambda i: (0, 0)),  # w2 resident (padded)
            pl.BlockSpec((1, OUT_PAD), lambda i: (0, 0)),        # b2 resident (padded)
        ],
        out_specs=pl.BlockSpec((TB, OUT_PAD), lambda i: (i, 0)),
        compiler_params=pltpu.CompilerParams(
            dimension_semantics=("parallel",),   # megacore split on v7x
            vmem_limit_bytes=48 << 20,           # fits v7x 64 MiB; ample on v5e/v6e
        ),
        cost_estimate=cost,
    )(x, w1_c, b1_row, w2_c, b2_row)

    # Tiny (B, 2) slice + cast back to the caller dtype (negligible HBM traffic).
    return out_padded[:, :OUT_DIM].astype(x.dtype)


def init_params(key):
    """Deterministic init mimicking torch.nn.Linear: U(-1/sqrt(fan_in), +)."""
    k1, k2, k3, k4 = jax.random.split(key, 4)
    bound1 = 1.0 / jnp.sqrt(float(IN_DIM))
    bound2 = 1.0 / jnp.sqrt(float(HID_DIM))
    # Stored as (in_features, out_features) — transpose of PyTorch's (out, in).
    w1 = jax.random.uniform(k1, (IN_DIM, HID_DIM), jnp.float32, -bound1, bound1)
    b1 = jax.random.uniform(k2, (HID_DIM,), jnp.float32, -bound1, bound1)
    w2 = jax.random.uniform(k3, (HID_DIM, OUT_DIM), jnp.float32, -bound2, bound2)
    b2 = jax.random.uniform(k4, (OUT_DIM,), jnp.float32, -bound2, bound2)
    return w1, b1, w2, b2


if __name__ == "__main__":
    key = jax.random.PRNGKey(0)
    kx, kp = jax.random.split(key)

    B = 20  # deliberately NOT a multiple of the tile: exercises partial block + 2-step grid
    x = jax.random.normal(kx, (B, IN_DIM), jnp.float32)
    w1, b1, w2, b2 = init_params(kp)

    # Plain-JAX f32 reference.
    h_ref = x @ w1 + b1
    h_ref = jnp.where(h_ref > 0, h_ref, NEG_SLOPE * h_ref)
    ref = h_ref @ w2 + b2

    # f32 compute + f32 store path with a tiny batch tile: tight tolerance.
    prep_f32 = prepare_params(w1, b1, w2, b2, compute_dtype=jnp.float32)
    out_f32 = jax.block_until_ready(
        linear_mlp_forward(x, prep_f32, block_b=16, store_dtype=jnp.float32))
    assert out_f32.shape == (B, OUT_DIM)
    assert jnp.allclose(out_f32, ref, atol=1e-4, rtol=1e-4)

    # Production path: bf16 MXU operands + bf16 padded store, f32 accumulation.
    prep = prepare_params(w1, b1, w2, b2)
    out = jax.block_until_ready(linear_mlp_forward(x, prep))
    assert out.shape == (B, OUT_DIM)
    assert out.dtype == x.dtype
    assert jnp.allclose(out, ref, atol=5e-2, rtol=5e-2)

    print("KERNEL_OK")
</pallas_src>

<mosaic_0001>
module attributes {stable_mosaic.version = 11 : i64} {
  func.func @mlp_kernel(%arg0: i32, %arg1: memref<16x1024xf32, #tpu.memory_space<vmem>>, %arg2: memref<1024x256xf32, #tpu.memory_space<vmem>>, %arg3: memref<1x256xf32, #tpu.memory_space<vmem>>, %arg4: memref<256x128xf32, #tpu.memory_space<vmem>>, %arg5: memref<1x128xf32, #tpu.memory_space<vmem>>, %arg6: memref<16x128xf32, #tpu.memory_space<vmem>>) attributes {dimension_semantics = [#tpu.dimension_semantics<parallel>], iteration_bounds = array<i64: 2>, scalar_prefetch = 0 : i64, scratch_operands = 0 : i64, tpu.core_type = #tpu.core_type<tc>, window_params = [{transform_indices = @transform_0, window_bounds = array<i64: 16, 1024>}, {pipeline_mode = #tpu.pipeline_mode<synchronous>, transform_indices = @transform_1, window_bounds = array<i64: 1024, 256>}, {pipeline_mode = #tpu.pipeline_mode<synchronous>, transform_indices = @transform_2, window_bounds = array<i64: 1, 256>}, {pipeline_mode = #tpu.pipeline_mode<synchronous>, transform_indices = @transform_3, window_bounds = array<i64: 256, 128>}, {pipeline_mode = #tpu.pipeline_mode<synchronous>, transform_indices = @transform_4, window_bounds = array<i64: 1, 128>}, {transform_indices = @transform_5, window_bounds = array<i64: 16, 128>}]} {
    %c0 = arith.constant 0 : index
    %c0_0 = arith.constant 0 : index
    %0 = vector.load %arg1[%c0, %c0_0] : memref<16x1024xf32, #tpu.memory_space<vmem>>, vector<16x1024xf32>
    %c0_1 = arith.constant 0 : index
    %c0_2 = arith.constant 0 : index
    %1 = vector.load %arg2[%c0_1, %c0_2] : memref<1024x256xf32, #tpu.memory_space<vmem>>, vector<1024x256xf32>
    %cst = arith.constant dense<0.000000e+00> : vector<16x256xf32>
    %2 = tpu.matmul %0, %1, %cst {dimension_numbers = #tpu.dot_dimension_numbers<[1], [0], [0], [1], [0, 0, 1, 1], [], []>} : vector<16x1024xf32>, vector<1024x256xf32>, vector<16x256xf32> -> vector<16x256xf32>
    %c0_3 = arith.constant 0 : index
    %c0_4 = arith.constant 0 : index
    %3 = vector.load %arg3[%c0_3, %c0_4] : memref<1x256xf32, #tpu.memory_space<vmem>>, vector<1x256xf32>
    %4 = vector.broadcast %3 : vector<1x256xf32> to vector<16x256xf32>
    %5 = arith.addf %2, %4 : vector<16x256xf32>
    %cst_5 = arith.constant 0.00999999977 : f32
    %6 = vector.broadcast %cst_5 : f32 to vector<16x256xf32>
    %7 = arith.mulf %6, %5 : vector<16x256xf32>
    %8 = arith.maximumf %5, %7 : vector<16x256xf32>
    %c0_6 = arith.constant 0 : index
    %c0_7 = arith.constant 0 : index
    %9 = vector.load %arg4[%c0_6, %c0_7] : memref<256x128xf32, #tpu.memory_space<vmem>>, vector<256x128xf32>
    %cst_8 = arith.constant dense<0.000000e+00> : vector<16x128xf32>
    %10 = tpu.matmul %8, %9, %cst_8 {dimension_numbers = #tpu.dot_dimension_numbers<[1], [0], [0], [1], [0, 0, 1, 1], [], []>} : vector<16x256xf32>, vector<256x128xf32>, vector<16x128xf32> -> vector<16x128xf32>
    %c0_9 = arith.constant 0 : index
    %c0_10 = arith.constant 0 : index
    %11 = vector.load %arg5[%c0_9, %c0_10] : memref<1x128xf32, #tpu.memory_space<vmem>>, vector<1x128xf32>
    %12 = vector.broadcast %11 : vector<1x128xf32> to vector<16x128xf32>
    %13 = arith.addf %10, %12 : vector<16x128xf32>
    %c0_11 = arith.constant 0 : index
    %c0_12 = arith.constant 0 : index
    %14 = vector.load %arg6[%c0_11, %c0_12] : memref<16x128xf32, #tpu.memory_space<vmem>>, vector<16x128xf32>
    tpu.vector_store %arg6[%c0_11, %c0_12], %13 {strides = array<i32>} : memref<16x128xf32, #tpu.memory_space<vmem>>, vector<16x128xf32>,
    return
  }
  func.func @transform_0(%arg0: i32) -> (i32, i32) {
    %c0_i32 = arith.constant 0 : i32
    %c0_i32_0 = arith.constant 0 : i32
    return %arg0, %c0_i32 : i32, i32
  }
  func.func @transform_1(%arg0: i32) -> (i32, i32) {
    %c0_i32 = arith.constant 0 : i32
    %c0_i32_0 = arith.constant 0 : i32
    %c0_i32_1 = arith.constant 0 : i32
    return %c0_i32, %c0_i32_0 : i32, i32
  }
  func.func @transform_2(%arg0: i32) -> (i32, i32) {
    %c0_i32 = arith.constant 0 : i32
    %c0_i32_0 = arith.constant 0 : i32
    %c0_i32_1 = arith.constant 0 : i32
    return %c0_i32, %c0_i32_0 : i32, i32
  }
  func.func @transform_3(%arg0: i32) -> (i32, i32) {
    %c0_i32 = arith.constant 0 : i32
    %c0_i32_0 = arith.constant 0 : i32
    %c0_i32_1 = arith.constant 0 : i32
    return %c0_i32, %c0_i32_0 : i32, i32
  }
  func.func @transform_4(%arg0: i32) -> (i32, i32) {
    %c0_i32 = arith.constant 0 : i32
    %c0_i32_0 = arith.constant 0 : i32
    %c0_i32_1 = arith.constant 0 : i32
    return %c0_i32, %c0_i32_0 : i32, i32
  }
  func.func @transform_5(%arg0: i32) -> (i32, i32) {
    %c0_i32 = arith.constant 0 : i32
    %c0_i32_0 = arith.constant 0 : i32
    return %arg0, %c0_i32 : i32, i32
  }
}

</mosaic_0001>

<llo_original>
// kernel: tpu_custom_call.1
$region0: #{tpu_custom_call.1}
  #allocation0 [shape = 'u32[]', space=smem, size = 0x4, offset = 0x4, fixed_abs, tag = 'smem constant byte address 0x4 - core index']
  #allocation1 [shape = 'u32[144,128]{1,0:T(1,128)}', space=vmem, size = 0x12000, scoped, tag = 'internal scratch']
  %s0 = inlined_call_operand.hbm [shape: f32[20,1024], index: 0, kind: input, shape index: {}]
  %s1 = inlined_call_operand.hbm [shape: f32[1024,256], index: 1, kind: input, shape index: {}]
  %s2 = inlined_call_operand.vmem [shape: f32[1,256], index: 2, kind: input, shape index: {}]
  %s3 = inlined_call_operand.hbm [shape: f32[256,128], index: 3, kind: input, shape index: {}]
  %s4 = inlined_call_operand.vmem [shape: f32[1,128], index: 4, kind: input, shape index: {}]
  %s5 = inlined_call_operand.hbm [shape: f32[20,128], index: 5, kind: output, shape index: {}]
  %s6 = sld [smem:[#allocation0]]
  $region65: #{tpu_custom_call.1} parent=0
    _
  %s8 = ssub.s32 1, %s6
  %s9 = scalar_select 0, %s8, %s6
  $region1: #{tpu_custom_call.1} parent=0
    #allocation2 [shape = 'u8[131072]{0}', space=vmem, size = 0x20000, scoped, tag = 'input window, operand 0']
    #allocation3 [shape = 's32[2]{0}', space=sflag, size = 0x8, scoped, tag = 'scoped memory for tpu_custom_call.1']
    #allocation4 [shape = 's32[2]{0}', space=sflag, size = 0x8, scoped, tag = 'scoped memory for tpu_custom_call.1']
    #allocation5 [shape = 'u8[1048576]{0}', space=vmem, size = 0x100000, scoped, tag = 'input window, operand 1, single buffered']
    #allocation6 [shape = 's32[1]{0}', space=sflag, size = 0x4, scoped, tag = 'scoped memory for tpu_custom_call.1']
    #allocation7 [shape = 'u8[131072]{0}', space=vmem, size = 0x20000, scoped, tag = 'input window, operand 3, single buffered']
    #allocation8 [shape = 'u8[16384]{0}', space=vmem, size = 0x4000, scoped, tag = 'output window, operand 0']
    %10 = vsyncpa [#allocation3], 0
    %s11 = scalar_lea.sflag [#allocation3], 1
    %12 = vsyncpa %s11, 0
    %13 = vsyncpa [#allocation6], 0
    %14 = vsyncpa [#allocation4], 0
    %s15 = scalar_lea.sflag [#allocation4], 1
    %16 = vsyncpa %s15, 0
    loop: start=0, step=1, limit=4
    $region2: #{tpu_custom_call.1} parent=1 // loop_pre_header
      _
    $region3: #{tpu_custom_call.1} parent=1 // loop_header
      %s18 = sphi 0, %s22
      %p19 = scmp.ge.s32.totalorder %s18, 4
      %s28 = sphi 0, %s30
      %s31 = sphi 0, %s28
      %s32 = sphi 0, %s31
      %s48 = sphi 0, %s32
      %s52 = sphi 0, %s52
      %s54 = sphi 0, %s52
      %s55 = sphi 0, %s54
      %s69 = sphi 0, %s55
      %s73 = sphi 0, %s73
      %s75 = sphi 0, %s73
      %s76 = sphi 0, %s75
      %s90 = sphi 0, %s76
      %s94 = sphi 0, %s94
      %s96 = sphi 0, %s94
      %s97 = sphi 0, %s96
      %s111 = sphi 0, %s97
      %s115 = sphi 0, %s115
      %s117 = sphi 0, %s115
      %s118 = sphi 0, %s117
      %s132 = sphi 0, %s118
      %s138 = sphi 0, %s140
      %s141 = sphi 0, %s138
      %s142 = sphi 0, %s141
      %s158 = sphi 0, %s142
    $region4: #{tpu_custom_call.1} parent=1 // loop_header_branch
      %21 = sbr.rel (%p19) target = $region8
    $region5: #{tpu_custom_call.1} parent=1 // loop_body
      %s23 = ssub.s32 %s18, 1
      %s24 = ssub.s32 %s18, 2
      %s25 = sadd.s32 %s18, 1
      %s26 = ssub.s32 %s18, %s25
      %p27 = scmp.eq.s32.totalorder %s26, 0
      %s29 = sadd.s32 %s28, 1
      %s30 = scalar_select %p27, %s28, %s29
      %p33 = pneg %p27
      %p34 = scmp.eq.s32.totalorder %s18, 1
      %p35 = por %p33, %p34
      %p36 = scmp.ne.s32.totalorder %s28, %s31
      %p37 = scmp.eq.s32.totalorder %s18, 0
      %p38 = por %p36, %p37
      %p39 = scmp.ne.s32.totalorder %s28, %s31
      %p40 = scmp.eq.s32.totalorder %s23, 1
      %p41 = por %p39, %p40
      %p42 = scmp.ne.s32.totalorder %s31, %s32
      %p43 = scmp.eq.s32.totalorder %s23, 0
      %p44 = por %p42, %p43
      %p45 = scmp.ne.s32.totalorder %s31, %s32
      %p46 = scmp.eq.s32.totalorder %s24, 1
      %p47 = por %p45, %p46
      %p49 = scmp.ne.s32.totalorder %s32, %s48
      %p50 = scmp.eq.s32.totalorder %s24, 0
      %p51 = por %p49, %p50
      %s53 = sadd.s32 %s52, 1
      %p56 = scmp.eq.s32.totalorder %s18, 1
      %p57 = scmp.ne.s32.totalorder %s52, %s54
      %p58 = scmp.eq.s32.totalorder %s18, 0
      %p59 = por %p57, %p58
      %p60 = scmp.ne.s32.totalorder %s52, %s54
      %p61 = scmp.eq.s32.totalorder %s23, 1
      %p62 = por %p60, %p61
      %p63 = scmp.ne.s32.totalorder %s54, %s55
      %p64 = scmp.eq.s32.totalorder %s23, 0
      %p65 = por %p63, %p64
      %p66 = scmp.ne.s32.totalorder %s54, %s55
      %p67 = scmp.eq.s32.totalorder %s24, 1
      %p68 = por %p66, %p67
      %p70 = scmp.ne.s32.totalorder %s55, %s69
      %p71 = scmp.eq.s32.totalorder %s24, 0
      %p72 = por %p70, %p71
      %s74 = sadd.s32 %s73, 1
      %p77 = scmp.eq.s32.totalorder %s18, 1
      %p78 = scmp.ne.s32.totalorder %s73, %s75
      %p79 = scmp.eq.s32.totalorder %s18, 0
      %p80 = por %p78, %p79
      %p81 = scmp.ne.s32.totalorder %s73, %s75
      %p82 = scmp.eq.s32.totalorder %s23, 1
      %p83 = por %p81, %p82
      %p84 = scmp.ne.s32.totalorder %s75, %s76
      %p85 = scmp.eq.s32.totalorder %s23, 0
      %p86 = por %p84, %p85
      %p87 = scmp.ne.s32.totalorder %s75, %s76
      %p88 = scmp.eq.s32.totalorder %s24, 1
      %p89 = por %p87, %p88
      %p91 = scmp.ne.s32.totalorder %s76, %s90
      %p92 = scmp.eq.s32.totalorder %s24, 0
      %p93 = por %p91, %p92
      %s95 = sadd.s32 %s94, 1
      %p98 = scmp.eq.s32.totalorder %s18, 1
      %p99 = scmp.ne.s32.totalorder %s94, %s96
      %p100 = scmp.eq.s32.totalorder %s18, 0
      %p101 = por %p99, %p100
      %p102 = scmp.ne.s32.totalorder %s94, %s96
      %p103 = scmp.eq.s32.totalorder %s23, 1
      %p104 = por %p102, %p103
      %p105 = scmp.ne.s32.totalorder %s96, %s97
      %p106 = scmp.eq.s32.totalorder %s23, 0
      %p107 = por %p105, %p106
      %p108 = scmp.ne.s32.totalorder %s96, %s97
      %p109 = scmp.eq.s32.totalorder %s24, 1
      %p110 = por %p108, %p109
      %p112 = scmp.ne.s32.totalorder %s97, %s111
      %p113 = scmp.eq.s32.totalorder %s24, 0
      %p114 = por %p112, %p113
      %s116 = sadd.s32 %s115, 1
      %p119 = scmp.eq.s32.totalorder %s18, 1
      %p120 = scmp.ne.s32.totalorder %s115, %s117
      %p121 = scmp.eq.s32.totalorder %s18, 0
      %p122 = por %p120, %p121
      %p123 = scmp.ne.s32.totalorder %s115, %s117
      %p124 = scmp.eq.s32.totalorder %s23, 1
      %p125 = por %p123, %p124
      %p126 = scmp.ne.s32.totalorder %s117, %s118
      %p127 = scmp.eq.s32.totalorder %s23, 0
      %p128 = por %p126, %p127
      %p129 = scmp.ne.s32.totalorder %s117, %s118
      %p130 = scmp.eq.s32.totalorder %s24, 1
      %p131 = por %p129, %p130
      %p133 = scmp.ne.s32.totalorder %s118, %s132
      %p134 = scmp.eq.s32.totalorder %s24, 0
      %p135 = por %p133, %p134
      %s136 = ssub.s32 %s18, %s25
      %p137 = scmp.eq.s32.totalorder %s136, 0
      %s139 = sadd.s32 %s138, 1
      %s140 = scalar_select %p137, %s138, %s139
      %p143 = pneg %p137
      %p144 = scmp.eq.s32.totalorder %s18, 1
      %p145 = por %p143, %p144
      %p146 = scmp.ne.s32.totalorder %s138, %s141
      %p147 = scmp.eq.s32.totalorder %s18, 0
      %p148 = por %p146, %p147
      %p149 = scmp.ne.s32.totalorder %s138, %s141
      %p150 = scmp.eq.s32.totalorder %s23, 1
      %p151 = por %p149, %p150
      %p152 = scmp.ne.s32.totalorder %s141, %s142
      %p153 = scmp.eq.s32.totalorder %s23, 0
      %p154 = por %p152, %p153
      %p155 = scmp.ne.s32.totalorder %s141, %s142
      %p156 = scmp.eq.s32.totalorder %s24, 1
      %p157 = por %p155, %p156
      %p159 = scmp.ne.s32.totalorder %s142, %s158
      %p160 = scmp.eq.s32.totalorder %s24, 0
      %p161 = por %p159, %p160
      %p162 = scmp.le.s32.totalorder 1, %s18
      %p163 = scmp.lt.s32.totalorder %s18, 3
      %p164 = pnand %p162, %p163
      %p165 = pneg %p164
      // Predicated region
      $region9: #{tpu_custom_call.1} parent=5 // pred_check
        _
      $region10: #{tpu_custom_call.1} parent=5 // pred_check_branch
        %167 = sbr.rel (%p164) target = $region12
      $region11: #{tpu_custom_call.1} parent=5 // pred_region
        %s168 = ssub.s32 %s18, 1
        // Predicated region
        $region13: #{tpu_custom_call.1} parent=11 // pred_check
          %p169 = pneg %p65
        $region14: #{tpu_custom_call.1} parent=11 // pred_check_branch
          %171 = sbr.rel (%p169) target = $region16
        $region15: #{tpu_custom_call.1} parent=11 // pred_region
          %s173 = ssub.s32 32768, 32768
          %174 = vsyncadd [#allocation6], %s173
          %s175 = sshll.u32 [#allocation5], 4
          %s176 = int_to_ptr.vmem [resolvable:$true] %s175
          %181 = dma.hbm_to_vmem [thread:$0]  %s1, 32768, %s176, [#allocation6], 256, 256, 16
        $region16: #{tpu_custom_call.1} parent=11 // pred_fallthru
          _
        // Predicated region
        $region17: #{tpu_custom_call.1} parent=11 // pred_check
          %p182 = pneg %p86
        $region18: #{tpu_custom_call.1} parent=11 // pred_check_branch
          %184 = sbr.rel (%p182) target = $region20
        $region19: #{tpu_custom_call.1} parent=11 // pred_region
          _
        $region20: #{tpu_custom_call.1} parent=11 // pred_fallthru
          _
        // Predicated region
        $region21: #{tpu_custom_call.1} parent=11 // pred_check
          %p185 = pneg %p107
        $region22: #{tpu_custom_call.1} parent=11 // pred_check_branch
          %187 = sbr.rel (%p185) target = $region24
        $region23: #{tpu_custom_call.1} parent=11 // pred_region
          %s189 = ssub.s32 4096, 4096
          %190 = vsyncadd [#allocation6], %s189
          %s191 = sshll.u32 [#allocation7], 4
          %s192 = int_to_ptr.vmem [resolvable:$true] %s191
          %197 = dma.hbm_to_vmem [thread:$0]  %s3, 4096, %s192, [#allocation6], 128, 128, 8
        $region24: #{tpu_custom_call.1} parent=11 // pred_fallthru
          _
        // Predicated region
        $region25: #{tpu_custom_call.1} parent=11 // pred_check
          %p198 = pneg %p128
        $region26: #{tpu_custom_call.1} parent=11 // pred_check_branch
          %200 = sbr.rel (%p198) target = $region28
        $region27: #{tpu_custom_call.1} parent=11 // pred_region
          _
        $region28: #{tpu_custom_call.1} parent=11 // pred_fallthru
          _
      $region12: #{tpu_custom_call.1} parent=5 // pred_fallthru
        _
      %p201 = scmp.lt.s32.totalorder %s18, 2
      // Predicated region
      $region29: #{tpu_custom_call.1} parent=5 // pred_check
        %p202 = pneg %p201
      $region30: #{tpu_custom_call.1} parent=5 // pred_check_branch
        %204 = sbr.rel (%p202) target = $region32
      $region31: #{tpu_custom_call.1} parent=5 // pred_region
        // Predicated region
        $region33: #{tpu_custom_call.1} parent=31 // pred_check
          %p205 = pneg %p38
        $region34: #{tpu_custom_call.1} parent=31 // pred_check_branch
          %207 = sbr.rel (%p205) target = $region36
        $region35: #{tpu_custom_call.1} parent=31 // pred_region
          %s208 = sand.u32 %s28, 1
          %s209 = scalar_lea.sflag [#allocation3], %s208
          %s210 = sand.u32 %s28, 1
          %s211 = smul.addr %s210, 128
          %s212 = scalar_lea.vmem [#allocation2], %s211
          %s213 = smul.u32 2, %s18
          %s214 = ssub.s32 3, %s213
          %p215 = scmp.lt.s32.totalorder %s214, 2
          %s216 = scalar_select %p215, %s214, 2
          %s217 = smul.u32 128, %s216
          %s218 = smul.u32 %s217, 8
          %s220 = ssub.s32 2048, %s218
          %221 = vsyncadd %s209, %s220
          %p222 = scmp.ne.s32.totalorder 0, %s218
          %s223 = smul.addr %s213, 8
          %s224 = smul.addr %s223, 128
          %s225 = scalar_lea.hbm %s0, %s224
          %s226 = smul.u32 64, %s216
          %s227 = sshll.u32 %s212, 4
          %s228 = int_to_ptr.vmem [resolvable:$true] %s227
          %s229 = sshll.u32 %s226, 4
          %233 = dma.hbm_to_vmem [thread:$0]  (%p222), %s225, %s229, %s228, %s209, 1024, 1024, 64
        $region36: #{tpu_custom_call.1} parent=31 // pred_fallthru
          _
      $region32: #{tpu_custom_call.1} parent=5 // pred_fallthru
        _
      %p234 = scmp.le.s32.totalorder 1, %s18
      %p235 = scmp.lt.s32.totalorder %s18, 3
      %p236 = pnand %p234, %p235
      %p237 = pneg %p236
      // Predicated region
      $region37: #{tpu_custom_call.1} parent=5 // pred_check
        _
      $region38: #{tpu_custom_call.1} parent=5 // pred_check_branch
        %239 = sbr.rel (%p236) target = $region40
      $region39: #{tpu_custom_call.1} parent=5 // pred_region
        %s240 = ssub.s32 %s18, 1
        %s241 = sand.u32 %s31, 1
        %s242 = scalar_lea.sflag [#allocation3], %s241
        %s243 = sand.u32 %s31, 1
        %s244 = smul.addr %s243, 128
        %s245 = scalar_lea.vmem [#allocation2], %s244
        // Predicated region
        $region41: #{tpu_custom_call.1} parent=39 // pred_check
          %p246 = pneg %p44
        $region42: #{tpu_custom_call.1} parent=39 // pred_check_branch
          %248 = sbr.rel (%p246) target = $region44
        $region43: #{tpu_custom_call.1} parent=39 // pred_region
          %249 = dma.done %s242, 2048
        $region44: #{tpu_custom_call.1} parent=39 // pred_fallthru
          _
        // Predicated region
        $region45: #{tpu_custom_call.1} parent=39 // pred_check
          %p250 = pneg %p65
        $region46: #{tpu_custom_call.1} parent=39 // pred_check_branch
          %252 = sbr.rel (%p250) target = $region48
        $region47: #{tpu_custom_call.1} parent=39 // pred_region
          %253 = dma.done [#allocation6], 32768
        $region48: #{tpu_custom_call.1} parent=39 // pred_fallthru
          _
        // Predicated region
        $region49: #{tpu_custom_call.1} parent=39 // pred_check
          %p254 = pneg %p107
        $region50: #{tpu_custom_call.1} parent=39 // pred_check_branch
          %256 = sbr.rel (%p254) target = $region52
        $region51: #{tpu_custom_call.1} parent=39 // pred_region
          %257 = dma.done [#allocation6], 4096
        $region52: #{tpu_custom_call.1} parent=39 // pred_fallthru
          _
        %s258 = sand.u32 %s31, 1
        %s259 = scalar_lea.sflag [#allocation3], %s258
        %s260 = sand.u32 %s31, 1
        %s261 = smul.addr %s260, 128
        %s262 = scalar_lea.vmem [#allocation2], %s261
        %p263 = pneg %p44
        %p264 = pneg %p41
        %p265 = pneg %p65
        %p266 = pneg %p62
        %p267 = pneg %p86
        %p268 = pneg %p83
        %p269 = pneg %p107
        %p270 = pneg %p104
        %p271 = pneg %p128
        %p272 = pneg %p125
        %p273 = pneg %p154
        %p274 = pneg %p151
        %s275 = sand.u32 %s141, 1
        %s276 = scalar_lea.sflag [#allocation4], %s275
        %s277 = sand.u32 %s141, 1
        %s278 = smul.addr %s277, 16
        %s279 = scalar_lea.vmem [#allocation8], %s278
        %s280 = smul.u32 2, %s23
        %s281 = ssub.s32 3, %s280
        %p282 = scmp.lt.s32.totalorder %s281, 2
        %s283 = scalar_select %p282, %s281, 2
        %s284 = smul.u32 128, %s283
        %s285 = smul.u32 %s284, 8
        %s286 = smul.u32 2, %s23
        %s287 = ssub.s32 3, %s286
        %p288 = scmp.lt.s32.totalorder %s287, 2
        %s289 = scalar_select %p288, %s287, 2
        %s290 = smul.u32 128, %s289
        %v291 = vld [vmem:[%s245] sm:$0xff]
        %v292 = vld [vmem:[%s245 + $0x8] sm:$0xff]
        %v293 = vld [vmem:[%s245 + $0x10] sm:$0xff]
        %v294 = vld [vmem:[%s245 + $0x18] sm:$0xff]
        %v295 = vld [vmem:[%s245 + $0x20] sm:$0xff]
        %v296 = vld [vmem:[%s245 + $0x28] sm:$0xff]
        %v297 = vld [vmem:[%s245 + $0x30] sm:$0xff]
        %v298 = vld [vmem:[%s245 + $0x38] sm:$0xff]
        %v299 = vld [vmem:[%s245 + $0x40] sm:$0xff]
        %v300 = vld [vmem:[%s245 + $0x48] sm:$0xff]
        %v301 = vld [vmem:[%s245 + $0x50] sm:$0xff]
        %v302 = vld [vmem:[%s245 + $0x58] sm:$0xff]
        %v303 = vld [vmem:[%s245 + $0x60] sm:$0xff]
        %v304 = vld [vmem:[%s245 + $0x68] sm:$0xff]
        %v305 = vld [vmem:[%s245 + $0x70] sm:$0xff]
        %v306 = vld [vmem:[%s245 + $0x78] sm:$0xff]
        %v307 = vld [vmem:[#allocation5] sm:$0xff]
        %v308 = vld [vmem:[#allocation5 + $0x8] sm:$0xff]
        %v309 = vld [vmem:[#allocation5 + $0x10] sm:$0xff]
        %v310 = vld [vmem:[#allocation5 + $0x18] sm:$0xff]
        %v311 = vld [vmem:[#allocation5 + $0x20] sm:$0xff]
        %v312 = vld [vmem:[#allocation5 + $0x28] sm:$0xff]
        %v313 = vld [vmem:[#allocation5 + $0x30] sm:$0xff]
        %v314 = vld [vmem:[#allocation5 + $0x38] sm:$0xff]
        %v315 = vld [vmem:[#allocation5 + $0x40] sm:$0xff]
        %v316 = vld [vmem:[#allocation5 + $0x48] sm:$0xff]
        %v317 = vld [vmem:[#allocation5 + $0x50] sm:$0xff]
        %v318 = vld [vmem:[#allocation5 + $0x58] sm:$0xff]
        %v319 = vld [vmem:[#allocation5 + $0x60] sm:$0xff]
        %v320 = vld [vmem:[#allocation5 + $0x68] sm:$0xff]
        %v321 = vld [vmem:[#allocation5 + $0x70] sm:$0xff]
        %v322 = vld [vmem:[#allocation5 + $0x78] sm:$0xff]
        %v323 = vld [vmem:[#allocation5 + $0x80] sm:$0xff]
        %v324 = vld [vmem:[#allocation5 + $0x88] sm:$0xff]
        %v325 = vld [vmem:[#allocation5 + $0x90] sm:$0xff]
        %v326 = vld [vmem:[#allocation5 + $0x98] sm:$0xff]
        %v327 = vld [vmem:[#allocation5 + $0xa0] sm:$0xff]
        %v328 = vld [vmem:[#allocation5 + $0xa8] sm:$0xff]
        %v329 = vld [vmem:[#allocation5 + $0xb0] sm:$0xff]
        %v330 = vld [vmem:[#allocation5 + $0xb8] sm:$0xff]
        %v331 = vld [vmem:[#allocation5 + $0xc0] sm:$0xff]
        %v332 = vld [vmem:[#allocation5 + $0xc8] sm:$0xff]
        %v333 = vld [vmem:[#allocation5 + $0xd0] sm:$0xff]
        %v334 = vld [vmem:[#allocation5 + $0xd8] sm:$0xff]
        %v335 = vld [vmem:[#allocation5 + $0xe0] sm:$0xff]
        %v336 = vld [vmem:[#allocation5 + $0xe8] sm:$0xff]
        %v337 = vld [vmem:[#allocation5 + $0xf0] sm:$0xff]
        %v338 = vld [vmem:[#allocation5 + $0xf8] sm:$0xff]
        %v339 = vld [vmem:[#allocation5 + $0x100] sm:$0xff]
        %v340 = vld [vmem:[#allocation5 + $0x108] sm:$0xff]
        %v341 = vld [vmem:[#allocation5 + $0x110] sm:$0xff]
        %v342 = vld [vmem:[#allocation5 + $0x118] sm:$0xff]
        %v343 = vld [vmem:[#allocation5 + $0x120] sm:$0xff]
        %v344 = vld [vmem:[#allocation5 + $0x128] sm:$0xff]
        %v345 = vld [vmem:[#allocation5 + $0x130] sm:$0xff]
        %v346 = vld [vmem:[#allocation5 + $0x138] sm:$0xff]
        %v347 = vld [vmem:[#allocation5 + $0x140] sm:$0xff]
        %v348 = vld [vmem:[#allocation5 + $0x148] sm:$0xff]
        %v349 = vld [vmem:[#allocation5 + $0x150] sm:$0xff]
        %v350 = vld [vmem:[#allocation5 + $0x158] sm:$0xff]
        %v351 = vld [vmem:[#allocation5 + $0x160] sm:$0xff]
        %v352 = vld [vmem:[#allocation5 + $0x168] sm:$0xff]
        %v353 = vld [vmem:[#allocation5 + $0x170] sm:$0xff]
        %v354 = vld [vmem:[#allocation5 + $0x178] sm:$0xff]
        %v355 = vld [vmem:[#allocation5 + $0x180] sm:$0xff]
        %v356 = vld [vmem:[#allocation5 + $0x188] sm:$0xff]
        %v357 = vld [vmem:[#allocation5 + $0x190] sm:$0xff]
        %v358 = vld [vmem:[#allocation5 + $0x198] sm:$0xff]
        %v359 = vld [vmem:[#allocation5 + $0x1a0] sm:$0xff]
        %v360 = vld [vmem:[#allocation5 + $0x1a8] sm:$0xff]
        %v361 = vld [vmem:[#allocation5 + $0x1b0] sm:$0xff]
        %v362 = vld [vmem:[#allocation5 + $0x1b8] sm:$0xff]
        %v363 = vld [vmem:[#allocation5 + $0x1c0] sm:$0xff]
        %v364 = vld [vmem:[#allocation5 + $0x1c8] sm:$0xff]
        %v365 = vld [vmem:[#allocation5 + $0x1d0] sm:$0xff]
        %v366 = vld [vmem:[#allocation5 + $0x1d8] sm:$0xff]
        %v367 = vld [vmem:[#allocation5 + $0x1e0] sm:$0xff]
        %v368 = vld [vmem:[#allocation5 + $0x1e8] sm:$0xff]
        %v369 = vld [vmem:[#allocation5 + $0x1f0] sm:$0xff]
        %v370 = vld [vmem:[#allocation5 + $0x1f8] sm:$0xff]
        %v371 = vld [vmem:[#allocation5 + $0x200] sm:$0xff]
        %v372 = vld [vmem:[#allocation5 + $0x208] sm:$0xff]
        %v373 = vld [vmem:[#allocation5 + $0x210] sm:$0xff]
        %v374 = vld [vmem:[#allocation5 + $0x218] sm:$0xff]
        %v375 = vld [vmem:[#allocation5 + $0x220] sm:$0xff]
        %v376 = vld [vmem:[#allocation5 + $0x228] sm:$0xff]
        %v377 = vld [vmem:[#allocation5 + $0x230] sm:$0xff]
        %v378 = vld [vmem:[#allocation5 + $0x238] sm:$0xff]
        %v379 = vld [vmem:[#allocation5 + $0x240] sm:$0xff]
        %v380 = vld [vmem:[#allocation5 + $0x248] sm:$0xff]
        %v381 = vld [vmem:[#allocation5 + $0x250] sm:$0xff]
        %v382 = vld [vmem:[#allocation5 + $0x258] sm:$0xff]
        %v383 = vld [vmem:[#allocation5 + $0x260] sm:$0xff]
        %v384 = vld [vmem:[#allocation5 + $0x268] sm:$0xff]
        %v385 = vld [vmem:[#allocation5 + $0x270] sm:$0xff]
        %v386 = vld [vmem:[#allocation5 + $0x278] sm:$0xff]
        %v387 = vld [vmem:[#allocation5 + $0x280] sm:$0xff]
        %v388 = vld [vmem:[#allocation5 + $0x288] sm:$0xff]
        %v389 = vld [vmem:[#allocation5 + $0x290] sm:$0xff]
        %v390 = vld [vmem:[#allocation5 + $0x298] sm:$0xff]
        %v391 = vld [vmem:[#allocation5 + $0x2a0] sm:$0xff]
        %v392 = vld [vmem:[#allocation5 + $0x2a8] sm:$0xff]
        %v393 = vld [vmem:[#allocation5 + $0x2b0] sm:$0xff]
        %v394 = vld [vmem:[#allocation5 + $0x2b8] sm:$0xff]
        %v395 = vld [vmem:[#allocation5 + $0x2c0] sm:$0xff]
        %v396 = vld [vmem:[#allocation5 + $0x2c8] sm:$0xff]
        %v397 = vld [vmem:[#allocation5 + $0x2d0] sm:$0xff]
        %v398 = vld [vmem:[#allocation5 + $0x2d8] sm:$0xff]
        %v399 = vld [vmem:[#allocation5 + $0x2e0] sm:$0xff]
        %v400 = vld [vmem:[#allocation5 + $0x2e8] sm:$0xff]
        %v401 = vld [vmem:[#allocation5 + $0x2f0] sm:$0xff]
        %v402 = vld [vmem:[#allocation5 + $0x2f8] sm:$0xff]
        %v403 = vld [vmem:[#allocation5 + $0x300] sm:$0xff]
        %v404 = vld [vmem:[#allocation5 + $0x308] sm:$0xff]
        %v405 = vld [vmem:[#allocation5 + $0x310] sm:$0xff]
        %v406 = vld [vmem:[#allocation5 + $0x318] sm:$0xff]
        %v407 = vld [vmem:[#allocation5 + $0x320] sm:$0xff]
        %v408 = vld [vmem:[#allocation5 + $0x328] sm:$0xff]
        %v409 = vld [vmem:[#allocation5 + $0x330] sm:$0xff]
        %v410 = vld [vmem:[#allocation5 + $0x338] sm:$0xff]
        %v411 = vld [vmem:[#allocation5 + $0x340] sm:$0xff]
        %v412 = vld [vmem:[#allocation5 + $0x348] sm:$0xff]
        %v413 = vld [vmem:[#allocation5 + $0x350] sm:$0xff]
        %v414 = vld [vmem:[#allocation5 + $0x358] sm:$0xff]
        %v415 = vld [vmem:[#allocation5 + $0x360] sm:$0xff]
        %v416 = vld [vmem:[#allocation5 + $0x368] sm:$0xff]
        %v417 = vld [vmem:[#allocation5 + $0x370] sm:$0xff]
        %v418 = vld [vmem:[#allocation5 + $0x378] sm:$0xff]
        %v419 = vld [vmem:[#allocation5 + $0x380] sm:$0xff]
        %v420 = vld [vmem:[#allocation5 + $0x388] sm:$0xff]
        %v421 = vld [vmem:[#allocation5 + $0x390] sm:$0xff]
        %v422 = vld [vmem:[#allocation5 + $0x398] sm:$0xff]
        %v423 = vld [vmem:[#allocation5 + $0x3a0] sm:$0xff]
        %v424 = vld [vmem:[#allocation5 + $0x3a8] sm:$0xff]
        %v425 = vld [vmem:[#allocation5 + $0x3b0] sm:$0xff]
        %v426 = vld [vmem:[#allocation5 + $0x3b8] sm:$0xff]
        %v427 = vld [vmem:[#allocation5 + $0x3c0] sm:$0xff]
        %v428 = vld [vmem:[#allocation5 + $0x3c8] sm:$0xff]
        %v429 = vld [vmem:[#allocation5 + $0x3d0] sm:$0xff]
        %v430 = vld [vmem:[#allocation5 + $0x3d8] sm:$0xff]
        %v431 = vld [vmem:[#allocation5 + $0x3e0] sm:$0xff]
        %v432 = vld [vmem:[#allocation5 + $0x3e8] sm:$0xff]
        %v433 = vld [vmem:[#allocation5 + $0x3f0] sm:$0xff]
        %v434 = vld [vmem:[#allocation5 + $0x3f8] sm:$0xff]
        %v435 = vld [vmem:[#allocation5 + $0x400] sm:$0xff]
        %v436 = vld [vmem:[#allocation5 + $0x408] sm:$0xff]
        %v437 = vld [vmem:[#allocation5 + $0x410] sm:$0xff]
        %v438 = vld [vmem:[#allocation5 + $0x418] sm:$0xff]
        %v439 = vld [vmem:[#allocation5 + $0x420] sm:$0xff]
        %v440 = vld [vmem:[#allocation5 + $0x428] sm:$0xff]
        %v441 = vld [vmem:[#allocation5 + $0x430] sm:$0xff]
        %v442 = vld [vmem:[#allocation5 + $0x438] sm:$0xff]
        %v443 = vld [vmem:[#allocation5 + $0x440] sm:$0xff]
        %v444 = vld [vmem:[#allocation5 + $0x448] sm:$0xff]
        %v445 = vld [vmem:[#allocation5 + $0x450] sm:$0xff]
        %v446 = vld [vmem:[#allocation5 + $0x458] sm:$0xff]
        %v447 = vld [vmem:[#allocation5 + $0x460] sm:$0xff]
        %v448 = vld [vmem:[#allocation5 + $0x468] sm:$0xff]
        %v449 = vld [vmem:[#allocation5 + $0x470] sm:$0xff]
        %v450 = vld [vmem:[#allocation5 + $0x478] sm:$0xff]
        %v451 = vld [vmem:[#allocation5 + $0x480] sm:$0xff]
        %v452 = vld [vmem:[#allocation5 + $0x488] sm:$0xff]
        %v453 = vld [vmem:[#allocation5 + $0x490] sm:$0xff]
        %v454 = vld [vmem:[#allocation5 + $0x498] sm:$0xff]
        %v455 = vld [vmem:[#allocation5 + $0x4a0] sm:$0xff]
        %v456 = vld [vmem:[#allocation5 + $0x4a8] sm:$0xff]
        %v457 = vld [vmem:[#allocation5 + $0x4b0] sm:$0xff]
        %v458 = vld [vmem:[#allocation5 + $0x4b8] sm:$0xff]
        %v459 = vld [vmem:[#allocation5 + $0x4c0] sm:$0xff]
        %v460 = vld [vmem:[#allocation5 + $0x4c8] sm:$0xff]
        %v461 = vld [vmem:[#allocation5 + $0x4d0] sm:$0xff]
        %v462 = vld [vmem:[#allocation5 + $0x4d8] sm:$0xff]
        %v463 = vld [vmem:[#allocation5 + $0x4e0] sm:$0xff]
        %v464 = vld [vmem:[#allocation5 + $0x4e8] sm:$0xff]
        %v465 = vld [vmem:[#allocation5 + $0x4f0] sm:$0xff]
        %v466 = vld [vmem:[#allocation5 + $0x4f8] sm:$0xff]
        %v467 = vld [vmem:[#allocation5 + $0x500] sm:$0xff]
        %v468 = vld [vmem:[#allocation5 + $0x508] sm:$0xff]
        %v469 = vld [vmem:[#allocation5 + $0x510] sm:$0xff]
        %v470 = vld [vmem:[#allocation5 + $0x518] sm:$0xff]
        %v471 = vld [vmem:[#allocation5 + $0x520] sm:$0xff]
        %v472 = vld [vmem:[#allocation5 + $0x528] sm:$0xff]
        %v473 = vld [vmem:[#allocation5 + $0x530] sm:$0xff]
        %v474 = vld [vmem:[#allocation5 + $0x538] sm:$0xff]
        %v475 = vld [vmem:[#allocation5 + $0x540] sm:$0xff]
        %v476 = vld [vmem:[#allocation5 + $0x548] sm:$0xff]
        %v477 = vld [vmem:[#allocation5 + $0x550] sm:$0xff]
        %v478 = vld [vmem:[#allocation5 + $0x558] sm:$0xff]
        %v479 = vld [vmem:[#allocation5 + $0x560] sm:$0xff]
        %v480 = vld [vmem:[#allocation5 + $0x568] sm:$0xff]
        %v481 = vld [vmem:[#allocation5 + $0x570] sm:$0xff]
        %v482 = vld [vmem:[#allocation5 + $0x578] sm:$0xff]
        %v483 = vld [vmem:[#allocation5 + $0x580] sm:$0xff]
        %v484 = vld [vmem:[#allocation5 + $0x588] sm:$0xff]
        %v485 = vld [vmem:[#allocation5 + $0x590] sm:$0xff]
        %v486 = vld [vmem:[#allocation5 + $0x598] sm:$0xff]
        %v487 = vld [vmem:[#allocation5 + $0x5a0] sm:$0xff]
        %v488 = vld [vmem:[#allocation5 + $0x5a8] sm:$0xff]
        %v489 = vld [vmem:[#allocation5 + $0x5b0] sm:$0xff]
        %v490 = vld [vmem:[#allocation5 + $0x5b8] sm:$0xff]
        %v491 = vld [vmem:[#allocation5 + $0x5c0] sm:$0xff]
        %v492 = vld [vmem:[#allocation5 + $0x5c8] sm:$0xff]
        %v493 = vld [vmem:[#allocation5 + $0x5d0] sm:$0xff]
        %v494 = vld [vmem:[#allocation5 + $0x5d8] sm:$0xff]
        %v495 = vld [vmem:[#allocation5 + $0x5e0] sm:$0xff]
        %v496 = vld [vmem:[#allocation5 + $0x5e8] sm:$0xff]
        %v497 = vld [vmem:[#allocation5 + $0x5f0] sm:$0xff]
        %v498 = vld [vmem:[#allocation5 + $0x5f8] sm:$0xff]
        %v499 = vld [vmem:[#allocation5 + $0x600] sm:$0xff]
        %v500 = vld [vmem:[#allocation5 + $0x608] sm:$0xff]
        %v501 = vld [vmem:[#allocation5 + $0x610] sm:$0xff]
        %v502 = vld [vmem:[#allocation5 + $0x618] sm:$0xff]
        %v503 = vld [vmem:[#allocation5 + $0x620] sm:$0xff]
        %v504 = vld [vmem:[#allocation5 + $0x628] sm:$0xff]
        %v505 = vld [vmem:[#allocation5 + $0x630] sm:$0xff]
        %v506 = vld [vmem:[#allocation5 + $0x638] sm:$0xff]
        %v507 = vld [vmem:[#allocation5 + $0x640] sm:$0xff]
        %v508 = vld [vmem:[#allocation5 + $0x648] sm:$0xff]
        %v509 = vld [vmem:[#allocation5 + $0x650] sm:$0xff]
        %v510 = vld [vmem:[#allocation5 + $0x658] sm:$0xff]
        %v511 = vld [vmem:[#allocation5 + $0x660] sm:$0xff]
        %v512 = vld [vmem:[#allocation5 + $0x668] sm:$0xff]
        %v513 = vld [vmem:[#allocation5 + $0x670] sm:$0xff]
        %v514 = vld [vmem:[#allocation5 + $0x678] sm:$0xff]
        %v515 = vld [vmem:[#allocation5 + $0x680] sm:$0xff]
        %v516 = vld [vmem:[#allocation5 + $0x688] sm:$0xff]
        %v517 = vld [vmem:[#allocation5 + $0x690] sm:$0xff]
        %v518 = vld [vmem:[#allocation5 + $0x698] sm:$0xff]
        %v519 = vld [vmem:[#allocation5 + $0x6a0] sm:$0xff]
        %v520 = vld [vmem:[#allocation5 + $0x6a8] sm:$0xff]
        %v521 = vld [vmem:[#allocation5 + $0x6b0] sm:$0xff]
        %v522 = vld [vmem:[#allocation5 + $0x6b8] sm:$0xff]
        %v523 = vld [vmem:[#allocation5 + $0x6c0] sm:$0xff]
        %v524 = vld [vmem:[#allocation5 + $0x6c8] sm:$0xff]
        %v525 = vld [vmem:[#allocation5 + $0x6d0] sm:$0xff]
        %v526 = vld [vmem:[#allocation5 + $0x6d8] sm:$0xff]
        %v527 = vld [vmem:[#allocation5 + $0x6e0] sm:$0xff]
        %v528 = vld [vmem:[#allocation5 + $0x6e8] sm:$0xff]
        %v529 = vld [vmem:[#allocation5 + $0x6f0] sm:$0xff]
        %v530 = vld [vmem:[#allocation5 + $0x6f8] sm:$0xff]
        %v531 = vld [vmem:[#allocation5 + $0x700] sm:$0xff]
        %v532 = vld [vmem:[#allocation5 + $0x708] sm:$0xff]
        %v533 = vld [vmem:[#allocation5 + $0x710] sm:$0xff]
        %v534 = vld [vmem:[#allocation5 + $0x718] sm:$0xff]
        %v535 = vld [vmem:[#allocation5 + $0x720] sm:$0xff]
        %v536 = vld [vmem:[#allocation5 + $0x728] sm:$0xff]
        %v537 = vld [vmem:[#allocation5 + $0x730] sm:$0xff]
        %v538 = vld [vmem:[#allocation5 + $0x738] sm:$0xff]
        %v539 = vld [vmem:[#allocation5 + $0x740] sm:$0xff]
        %v540 = vld [vmem:[#allocation5 + $0x748] sm:$0xff]
        %v541 = vld [vmem:[#allocation5 + $0x750] sm:$0xff]
        %v542 = vld [vmem:[#allocation5 + $0x758] sm:$0xff]
        %v543 = vld [vmem:[#allocation5 + $0x760] sm:$0xff]
        %v544 = vld [vmem:[#allocation5 + $0x768] sm:$0xff]
        %v545 = vld [vmem:[#allocation5 + $0x770] sm:$0xff]
        %v546 = vld [vmem:[#allocation5 + $0x778] sm:$0xff]
        %v547 = vld [vmem:[#allocation5 + $0x780] sm:$0xff]
        %v548 = vld [vmem:[#allocation5 + $0x788] sm:$0xff]
        %v549 = vld [vmem:[#allocation5 + $0x790] sm:$0xff]
        %v550 = vld [vmem:[#allocation5 + $0x798] sm:$0xff]
        %v551 = vld [vmem:[#allocation5 + $0x7a0] sm:$0xff]
        %v552 = vld [vmem:[#allocation5 + $0x7a8] sm:$0xff]
        %v553 = vld [vmem:[#allocation5 + $0x7b0] sm:$0xff]
        %v554 = vld [vmem:[#allocation5 + $0x7b8] sm:$0xff]
        %v555 = vld [vmem:[#allocation5 + $0x7c0] sm:$0xff]
        %v556 = vld [vmem:[#allocation5 + $0x7c8] sm:$0xff]
        %v557 = vld [vmem:[#allocation5 + $0x7d0] sm:$0xff]
        %v558 = vld [vmem:[#allocation5 + $0x7d8] sm:$0xff]
        %v559 = vld [vmem:[#allocation5 + $0x7e0] sm:$0xff]
        %v560 = vld [vmem:[#allocation5 + $0x7e8] sm:$0xff]
        %v561 = vld [vmem:[#allocation5 + $0x7f0] sm:$0xff]
        %v562 = vld [vmem:[#allocation5 + $0x7f8] sm:$0xff]
        %v563 = vld [vmem:[%s2] sm:$0x3]
        %v565 = vlaneseq
        %v566 = vshrl.u32 %v565, 7
        %v567 = vsub.s32 0, %v566
        %v568 = vrot.slane %v563, %v567
        %v569 = vlaneseq
        %v570 = vshrl.u32 %v569, 7
        %v571 = vsub.s32 1, %v570
        %v572 = vrot.slane %v563, %v571
        %575 = vmatprep.subr.mxu0 %v308
        %576 = vmatpush1.msra.mxu0 %v307
        %577 = vmatprep.subr.mxu0 %v310
        %578 = vmatpush1.msra.mxu0 %v309
        %579 = vmatprep.subr.mxu0 %v312
        %580 = vmatpush1.msra.mxu0 %v311
        %581 = vmatprep.subr.mxu0 %v314
        %582 = vmatpush1.msra.mxu0 %v313
        %583 = vmatprep.subr.mxu0 %v316
        %584 = vmatpush1.msra.mxu0 %v315
        %585 = vmatprep.subr.mxu0 %v318
        %586 = vmatpush1.msra.mxu0 %v317
        %587 = vmatprep.subr.mxu0 %v320
        %588 = vmatpush1.msra.mxu0 %v319
        %589 = vmatprep.subr.mxu0 %v322
        %590 = vmatpush1.msra.mxu0 %v321
        %591 = vmatprep.subr.mxu0 %v324
        %592 = vmatpush1.msra.mxu0 %v323
        %593 = vmatprep.subr.mxu0 %v326
        %594 = vmatpush1.msra.mxu0 %v325
        %595 = vmatprep.subr.mxu0 %v328
        %596 = vmatpush1.msra.mxu0 %v327
        %597 = vmatprep.subr.mxu0 %v330
        %598 = vmatpush1.msra.mxu0 %v329
        %599 = vmatprep.subr.mxu0 %v332
        %600 = vmatpush1.msra.mxu0 %v331
        %601 = vmatprep.subr.mxu0 %v334
        %602 = vmatpush1.msra.mxu0 %v333
        %603 = vmatprep.subr.mxu0 %v336
        %604 = vmatpush1.msra.mxu0 %v335
        %605 = vmatprep.subr.mxu0 %v338
        %606 = vmatpush1.msra.mxu0 %v337
        %607 = vmatprep.subr.mxu0 %v340
        %608 = vmatpush1.msra.mxu0 %v339
        %609 = vmatprep.subr.mxu0 %v342
        %610 = vmatpush1.msra.mxu0 %v341
        %611 = vmatprep.subr.mxu0 %v344
        %612 = vmatpush1.msra.mxu0 %v343
        %613 = vmatprep.subr.mxu0 %v346
        %614 = vmatpush1.msra.mxu0 %v345
        %615 = vmatprep.subr.mxu0 %v348
        %616 = vmatpush1.msra.mxu0 %v347
        %617 = vmatprep.subr.mxu0 %v350
        %618 = vmatpush1.msra.mxu0 %v349
        %619 = vmatprep.subr.mxu0 %v352
        %620 = vmatpush1.msra.mxu0 %v351
        %621 = vmatprep.subr.mxu0 %v354
        %622 = vmatpush1.msra.mxu0 %v353
        %623 = vmatprep.subr.mxu0 %v356
        %624 = vmatpush1.msra.mxu0 %v355
        %625 = vmatprep.subr.mxu0 %v358
        %626 = vmatpush1.msra.mxu0 %v357
        %627 = vmatprep.subr.mxu0 %v360
        %628 = vmatpush1.msra.mxu0 %v359
        %629 = vmatprep.subr.mxu0 %v362
        %630 = vmatpush1.msra.mxu0 %v361
        %631 = vmatprep.subr.mxu0 %v364
        %632 = vmatpush1.msra.mxu0 %v363
        %633 = vmatprep.subr.mxu0 %v366
        %634 = vmatpush1.msra.mxu0 %v365
        %635 = vmatprep.subr.mxu0 %v368
        %636 = vmatpush1.msra.mxu0 %v367
        %637 = vmatprep.subr.mxu0 %v370
        %638 = vmatpush1.msra.mxu0 %v369
        %639 = vmatprep.mubr.f32.mxu0 %v292
        %640 = vmatmul.mubr.f32.gmra.mrb[0].mxu0 %v291
        %v641 = vpop.f32.mrb[0].mxu0
        %v642 = vadd.f32 %v568, %v641
        %v643 = vpop.f32.mrb[0].mxu0
        %v644 = vadd.f32 %v572, %v643
        %645 = vmatprep.mubr.f32.mxu0 %v300
        %646 = vmatmul.mubr.f32.gmra.mrb[0].mxu0 %v299
        %v647 = vpop.f32.mrb[0].mxu0
        %v648 = vadd.f32 %v568, %v647
        %v649 = vpop.f32.mrb[0].mxu0
        %v650 = vadd.f32 %v572, %v649
        %651 = vdwg.mxu0
        %652 = vmatprep.subr.mxu0 %v372
        %653 = vmatpush1.msra.mxu0 %v371
        %654 = vmatprep.subr.mxu0 %v374
        %655 = vmatpush1.msra.mxu0 %v373
        %656 = vmatprep.subr.mxu0 %v376
        %657 = vmatpush1.msra.mxu0 %v375
        %658 = vmatprep.subr.mxu0 %v378
        %659 = vmatpush1.msra.mxu0 %v377
        %660 = vmatprep.subr.mxu0 %v380
        %661 = vmatpush1.msra.mxu0 %v379
        %662 = vmatprep.subr.mxu0 %v382
        %663 = vmatpush1.msra.mxu0 %v381
        %664 = vmatprep.subr.mxu0 %v384
        %665 = vmatpush1.msra.mxu0 %v383
        %666 = vmatprep.subr.mxu0 %v386
        %667 = vmatpush1.msra.mxu0 %v385
        %668 = vmatprep.subr.mxu0 %v388
        %669 = vmatpush1.msra.mxu0 %v387
        %670 = vmatprep.subr.mxu0 %v390
        %671 = vmatpush1.msra.mxu0 %v389
        %672 = vmatprep.subr.mxu0 %v392
        %673 = vmatpush1.msra.mxu0 %v391
        %674 = vmatprep.subr.mxu0 %v394
        %675 = vmatpush1.msra.mxu0 %v393
        %676 = vmatprep.subr.mxu0 %v396
        %677 = vmatpush1.msra.mxu0 %v395
        %678 = vmatprep.subr.mxu0 %v398
        %679 = vmatpush1.msra.mxu0 %v397
        %680 = vmatprep.subr.mxu0 %v400
        %681 = vmatpush1.msra.mxu0 %v399
        %682 = vmatprep.subr.mxu0 %v402
        %683 = vmatpush1.msra.mxu0 %v401
        %684 = vmatprep.subr.mxu0 %v404
        %685 = vmatpush1.msra.mxu0 %v403
        %686 = vmatprep.subr.mxu0 %v406
        %687 = vmatpush1.msra.mxu0 %v405
        %688 = vmatprep.subr.mxu0 %v408
        %689 = vmatpush1.msra.mxu0 %v407
        %690 = vmatprep.subr.mxu0 %v410
        %691 = vmatpush1.msra.mxu0 %v409
        %692 = vmatprep.subr.mxu0 %v412
        %693 = vmatpush1.msra.mxu0 %v411
        %694 = vmatprep.subr.mxu0 %v414
        %695 = vmatpush1.msra.mxu0 %v413
        %696 = vmatprep.subr.mxu0 %v416
        %697 = vmatpush1.msra.mxu0 %v415
        %698 = vmatprep.subr.mxu0 %v418
        %699 = vmatpush1.msra.mxu0 %v417
        %700 = vmatprep.subr.mxu0 %v420
        %701 = vmatpush1.msra.mxu0 %v419
        %702 = vmatprep.subr.mxu0 %v422
        %703 = vmatpush1.msra.mxu0 %v421
        %704 = vmatprep.subr.mxu0 %v424
        %705 = vmatpush1.msra.mxu0 %v423
        %706 = vmatprep.subr.mxu0 %v426
        %707 = vmatpush1.msra.mxu0 %v425
        %708 = vmatprep.subr.mxu0 %v428
        %709 = vmatpush1.msra.mxu0 %v427
        %710 = vmatprep.subr.mxu0 %v430
        %711 = vmatpush1.msra.mxu0 %v429
        %712 = vmatprep.subr.mxu0 %v432
        %713 = vmatpush1.msra.mxu0 %v431
        %714 = vmatprep.subr.mxu0 %v434
        %715 = vmatpush1.msra.mxu0 %v433
        %716 = vmatprep.mubr.f32.mxu0 %v294
        %717 = vmatmul.mubr.f32.gmra.mrb[0].mxu0 %v293
        %v718 = vpop.f32.mrb[0].mxu0
        %v719 = vadd.f32 %v642, %v718
        %v720 = vpop.f32.mrb[0].mxu0
        %v721 = vadd.f32 %v644, %v720
        %722 = vmatprep.mubr.f32.mxu0 %v302
        %723 = vmatmul.mubr.f32.gmra.mrb[0].mxu0 %v301
        %v724 = vpop.f32.mrb[0].mxu0
        %v725 = vadd.f32 %v648, %v724
        %v726 = vpop.f32.mrb[0].mxu0
        %v727 = vadd.f32 %v650, %v726
        %728 = vdwg.mxu0
        %729 = vmatprep.subr.mxu0 %v436
        %730 = vmatpush1.msra.mxu0 %v435
        %731 = vmatprep.subr.mxu0 %v438
        %732 = vmatpush1.msra.mxu0 %v437
        %733 = vmatprep.subr.mxu0 %v440
        %734 = vmatpush1.msra.mxu0 %v439
        %735 = vmatprep.subr.mxu0 %v442
        %736 = vmatpush1.msra.mxu0 %v441
        %737 = vmatprep.subr.mxu0 %v444
        %738 = vmatpush1.msra.mxu0 %v443
        %739 = vmatprep.subr.mxu0 %v446
        %740 = vmatpush1.msra.mxu0 %v445
        %741 = vmatprep.subr.mxu0 %v448
        %742 = vmatpush1.msra.mxu0 %v447
        %743 = vmatprep.subr.mxu0 %v450
        %744 = vmatpush1.msra.mxu0 %v449
        %745 = vmatprep.subr.mxu0 %v452
        %746 = vmatpush1.msra.mxu0 %v451
        %747 = vmatprep.subr.mxu0 %v454
        %748 = vmatpush1.msra.mxu0 %v453
        %749 = vmatprep.subr.mxu0 %v456
        %750 = vmatpush1.msra.mxu0 %v455
        %751 = vmatprep.subr.mxu0 %v458
        %752 = vmatpush1.msra.mxu0 %v457
        %753 = vmatprep.subr.mxu0 %v460
        %754 = vmatpush1.msra.mxu0 %v459
        %755 = vmatprep.subr.mxu0 %v462
        %756 = vmatpush1.msra.mxu0 %v461
        %757 = vmatprep.subr.mxu0 %v464
        %758 = vmatpush1.msra.mxu0 %v463
        %759 = vmatprep.subr.mxu0 %v466
        %760 = vmatpush1.msra.mxu0 %v465
        %761 = vmatprep.subr.mxu0 %v468
        %762 = vmatpush1.msra.mxu0 %v467
        %763 = vmatprep.subr.mxu0 %v470
        %764 = vmatpush1.msra.mxu0 %v469
        %765 = vmatprep.subr.mxu0 %v472
        %766 = vmatpush1.msra.mxu0 %v471
        %767 = vmatprep.subr.mxu0 %v474
        %768 = vmatpush1.msra.mxu0 %v473
        %769 = vmatprep.subr.mxu0 %v476
        %770 = vmatpush1.msra.mxu0 %v475
        %771 = vmatprep.subr.mxu0 %v478
        %772 = vmatpush1.msra.mxu0 %v477
        %773 = vmatprep.subr.mxu0 %v480
        %774 = vmatpush1.msra.mxu0 %v479
        %775 = vmatprep.subr.mxu0 %v482
        %776 = vmatpush1.msra.mxu0 %v481
        %777 = vmatprep.subr.mxu0 %v484
        %778 = vmatpush1.msra.mxu0 %v483
        %779 = vmatprep.subr.mxu0 %v486
        %780 = vmatpush1.msra.mxu0 %v485
        %781 = vmatprep.subr.mxu0 %v488
        %782 = vmatpush1.msra.mxu0 %v487
        %783 = vmatprep.subr.mxu0 %v490
        %784 = vmatpush1.msra.mxu0 %v489
        %785 = vmatprep.subr.mxu0 %v492
        %786 = vmatpush1.msra.mxu0 %v491
        %787 = vmatprep.subr.mxu0 %v494
        %788 = vmatpush1.msra.mxu0 %v493
        %789 = vmatprep.subr.mxu0 %v496
        %790 = vmatpush1.msra.mxu0 %v495
        %791 = vmatprep.subr.mxu0 %v498
        %792 = vmatpush1.msra.mxu0 %v497
        %793 = vmatprep.mubr.f32.mxu0 %v296
        %794 = vmatmul.mubr.f32.gmra.mrb[0].mxu0 %v295
        %v795 = vpop.f32.mrb[0].mxu0
        %v796 = vadd.f32 %v719, %v795
        %v797 = vpop.f32.mrb[0].mxu0
        %v798 = vadd.f32 %v721, %v797
        %799 = vmatprep.mubr.f32.mxu0 %v304
        %800 = vmatmul.mubr.f32.gmra.mrb[0].mxu0 %v303
        %v801 = vpop.f32.mrb[0].mxu0
        %v802 = vadd.f32 %v725, %v801
        %v803 = vpop.f32.mrb[0].mxu0
        %v804 = vadd.f32 %v727, %v803
        %805 = vdwg.mxu0
        %806 = vmatprep.subr.mxu0 %v500
        %807 = vmatpush1.msra.mxu0 %v499
        %808 = vmatprep.subr.mxu0 %v502
        %809 = vmatpush1.msra.mxu0 %v501
        %810 = vmatprep.subr.mxu0 %v504
        %811 = vmatpush1.msra.mxu0 %v503
        %812 = vmatprep.subr.mxu0 %v506
        %813 = vmatpush1.msra.mxu0 %v505
        %814 = vmatprep.subr.mxu0 %v508
        %815 = vmatpush1.msra.mxu0 %v507
        %816 = vmatprep.subr.mxu0 %v510
        %817 = vmatpush1.msra.mxu0 %v509
        %818 = vmatprep.subr.mxu0 %v512
        %819 = vmatpush1.msra.mxu0 %v511
        %820 = vmatprep.subr.mxu0 %v514
        %821 = vmatpush1.msra.mxu0 %v513
        %822 = vmatprep.subr.mxu0 %v516
        %823 = vmatpush1.msra.mxu0 %v515
        %824 = vmatprep.subr.mxu0 %v518
        %825 = vmatpush1.msra.mxu0 %v517
        %826 = vmatprep.subr.mxu0 %v520
        %827 = vmatpush1.msra.mxu0 %v519
        %828 = vmatprep.subr.mxu0 %v522
        %829 = vmatpush1.msra.mxu0 %v521
        %830 = vmatprep.subr.mxu0 %v524
        %831 = vmatpush1.msra.mxu0 %v523
        %832 = vmatprep.subr.mxu0 %v526
        %833 = vmatpush1.msra.mxu0 %v525
        %834 = vmatprep.subr.mxu0 %v528
        %835 = vmatpush1.msra.mxu0 %v527
        %836 = vmatprep.subr.mxu0 %v530
        %837 = vmatpush1.msra.mxu0 %v529
        %838 = vmatprep.subr.mxu0 %v532
        %839 = vmatpush1.msra.mxu0 %v531
        %840 = vmatprep.subr.mxu0 %v534
        %841 = vmatpush1.msra.mxu0 %v533
        %842 = vmatprep.subr.mxu0 %v536
        %843 = vmatpush1.msra.mxu0 %v535
        %844 = vmatprep.subr.mxu0 %v538
        %845 = vmatpush1.msra.mxu0 %v537
        %846 = vmatprep.subr.mxu0 %v540
        %847 = vmatpush1.msra.mxu0 %v539
        %848 = vmatprep.subr.mxu0 %v542
        %849 = vmatpush1.msra.mxu0 %v541
        %850 = vmatprep.subr.mxu0 %v544
        %851 = vmatpush1.msra.mxu0 %v543
        %852 = vmatprep.subr.mxu0 %v546
        %853 = vmatpush1.msra.mxu0 %v545
        %854 = vmatprep.subr.mxu0 %v548
        %855 = vmatpush1.msra.mxu0 %v547
        %856 = vmatprep.subr.mxu0 %v550
        %857 = vmatpush1.msra.mxu0 %v549
        %858 = vmatprep.subr.mxu0 %v552
        %859 = vmatpush1.msra.mxu0 %v551
        %860 = vmatprep.subr.mxu0 %v554
        %861 = vmatpush1.msra.mxu0 %v553
        %862 = vmatprep.subr.mxu0 %v556
        %863 = vmatpush1.msra.mxu0 %v555
        %864 = vmatprep.subr.mxu0 %v558
        %865 = vmatpush1.msra.mxu0 %v557
        %866 = vmatprep.subr.mxu0 %v560
        %867 = vmatpush1.msra.mxu0 %v559
        %868 = vmatprep.subr.mxu0 %v562
        %869 = vmatpush1.msra.mxu0 %v561
        %870 = vmatprep.mubr.f32.mxu0 %v298
        %871 = vmatmul.mubr.f32.gmra.mrb[0].mxu0 %v297
        %v872 = vpop.f32.mrb[0].mxu0
        %v873 = vadd.f32 %v796, %v872
        %v874 = vpop.f32.mrb[0].mxu0
        %v875 = vadd.f32 %v798, %v874
        %876 = vmatprep.mubr.f32.mxu0 %v306
        %877 = vmatmul.mubr.f32.gmra.mrb[0].mxu0 %v305
        %v878 = vpop.f32.mrb[0].mxu0
        %v879 = vadd.f32 %v802, %v878
        %v880 = vpop.f32.mrb[0].mxu0
        %v881 = vadd.f32 %v804, %v880
        %882 = vdwg.mxu0
        %v883 = vmul.f32 %v873, 0.01
        %v884 = vmul.f32 %v875, 0.01
        %v885 = vmul.f32 %v879, 0.01
        %v886 = vmul.f32 %v881, 0.01
        %v887 = vmax.f32 %v873, %v883
        %v888 = vmax.f32 %v875, %v884
        %v889 = vmax.f32 %v879, %v885
        %v890 = vmax.f32 %v881, %v886
        %v891 = vld [vmem:[#allocation7] sm:$0xff]
        %v892 = vld [vmem:[#allocation7 + $0x8] sm:$0xff]
        %v893 = vld [vmem:[#allocation7 + $0x10] sm:$0xff]
        %v894 = vld [vmem:[#allocation7 + $0x18] sm:$0xff]
        %v895 = vld [vmem:[#allocation7 + $0x20] sm:$0xff]
        %v896 = vld [vmem:[#allocation7 + $0x28] sm:$0xff]
        %v897 = vld [vmem:[#allocation7 + $0x30] sm:$0xff]
        %v898 = vld [vmem:[#allocation7 + $0x38] sm:$0xff]
        %v899 = vld [vmem:[#allocation7 + $0x40] sm:$0xff]
        %v900 = vld [vmem:[#allocation7 + $0x48] sm:$0xff]
        %v901 = vld [vmem:[#allocation7 + $0x50] sm:$0xff]
        %v902 = vld [vmem:[#allocation7 + $0x58] sm:$0xff]
        %v903 = vld [vmem:[#allocation7 + $0x60] sm:$0xff]
        %v904 = vld [vmem:[#allocation7 + $0x68] sm:$0xff]
        %v905 = vld [vmem:[#allocation7 + $0x70] sm:$0xff]
        %v906 = vld [vmem:[#allocation7 + $0x78] sm:$0xff]
        %v907 = vld [vmem:[#allocation7 + $0x80] sm:$0xff]
        %v908 = vld [vmem:[#allocation7 + $0x88] sm:$0xff]
        %v909 = vld [vmem:[#allocation7 + $0x90] sm:$0xff]
        %v910 = vld [vmem:[#allocation7 + $0x98] sm:$0xff]
        %v911 = vld [vmem:[#allocation7 + $0xa0] sm:$0xff]
        %v912 = vld [vmem:[#allocation7 + $0xa8] sm:$0xff]
        %v913 = vld [vmem:[#allocation7 + $0xb0] sm:$0xff]
        %v914 = vld [vmem:[#allocation7 + $0xb8] sm:$0xff]
        %v915 = vld [vmem:[#allocation7 + $0xc0] sm:$0xff]
        %v916 = vld [vmem:[#allocation7 + $0xc8] sm:$0xff]
        %v917 = vld [vmem:[#allocation7 + $0xd0] sm:$0xff]
        %v918 = vld [vmem:[#allocation7 + $0xd8] sm:$0xff]
        %v919 = vld [vmem:[#allocation7 + $0xe0] sm:$0xff]
        %v920 = vld [vmem:[#allocation7 + $0xe8] sm:$0xff]
        %v921 = vld [vmem:[#allocation7 + $0xf0] sm:$0xff]
        %v922 = vld [vmem:[#allocation7 + $0xf8] sm:$0xff]
        %v923 = vld [vmem:[%s4] sm:$0x1]
        %v925 = vlaneseq
        %v926 = vshrl.u32 %v925, 7
        %v927 = vsub.s32 0, %v926
        %v928 = vrot.slane %v923, %v927
        %930 = vmatprep.subr.mxu0 0.0
        %931 = vmatpush1.msra.mxu0 %v891
        %932 = vmatprep.subr.mxu0 0.0
        %933 = vmatpush1.msra.mxu0 %v892
        %934 = vmatprep.subr.mxu0 0.0
        %935 = vmatpush1.msra.mxu0 %v893
        %936 = vmatprep.subr.mxu0 0.0
        %937 = vmatpush1.msra.mxu0 %v894
        %938 = vmatprep.subr.mxu0 0.0
        %939 = vmatpush1.msra.mxu0 %v895
        %940 = vmatprep.subr.mxu0 0.0
        %941 = vmatpush1.msra.mxu0 %v896
        %942 = vmatprep.subr.mxu0 0.0
        %943 = vmatpush1.msra.mxu0 %v897
        %944 = vmatprep.subr.mxu0 0.0
        %945 = vmatpush1.msra.mxu0 %v898
        %946 = vmatprep.subr.mxu0 0.0
        %947 = vmatpush1.msra.mxu0 %v899
        %948 = vmatprep.subr.mxu0 0.0
        %949 = vmatpush1.msra.mxu0 %v900
        %950 = vmatprep.subr.mxu0 0.0
        %951 = vmatpush1.msra.mxu0 %v901
        %952 = vmatprep.subr.mxu0 0.0
        %953 = vmatpush1.msra.mxu0 %v902
        %954 = vmatprep.subr.mxu0 0.0
        %955 = vmatpush1.msra.mxu0 %v903
        %956 = vmatprep.subr.mxu0 0.0
        %957 = vmatpush1.msra.mxu0 %v904
        %958 = vmatprep.subr.mxu0 0.0
        %959 = vmatpush1.msra.mxu0 %v905
        %960 = vmatprep.subr.mxu0 0.0
        %961 = vmatpush1.msra.mxu0 %v906
        %962 = vmatprep.subr.mxu0 0.0
        %963 = vmatpush1.msra.mxu0 %v907
        %964 = vmatprep.subr.mxu0 0.0
        %965 = vmatpush1.msra.mxu0 %v908
        %966 = vmatprep.subr.mxu0 0.0
        %967 = vmatpush1.msra.mxu0 %v909
        %968 = vmatprep.subr.mxu0 0.0
        %969 = vmatpush1.msra.mxu0 %v910
        %970 = vmatprep.subr.mxu0 0.0
        %971 = vmatpush1.msra.mxu0 %v911
        %972 = vmatprep.subr.mxu0 0.0
        %973 = vmatpush1.msra.mxu0 %v912
        %974 = vmatprep.subr.mxu0 0.0
        %975 = vmatpush1.msra.mxu0 %v913
        %976 = vmatprep.subr.mxu0 0.0
        %977 = vmatpush1.msra.mxu0 %v914
        %978 = vmatprep.subr.mxu0 0.0
        %979 = vmatpush1.msra.mxu0 %v915
        %980 = vmatprep.subr.mxu0 0.0
        %981 = vmatpush1.msra.mxu0 %v916
        %982 = vmatprep.subr.mxu0 0.0
        %983 = vmatpush1.msra.mxu0 %v917
        %984 = vmatprep.subr.mxu0 0.0
        %985 = vmatpush1.msra.mxu0 %v918
        %986 = vmatprep.subr.mxu0 0.0
        %987 = vmatpush1.msra.mxu0 %v919
        %988 = vmatprep.subr.mxu0 0.0
        %989 = vmatpush1.msra.mxu0 %v920
        %990 = vmatprep.subr.mxu0 0.0
        %991 = vmatpush1.msra.mxu0 %v921
        %992 = vmatprep.subr.mxu0 0.0
        %993 = vmatpush1.msra.mxu0 %v922
        %994 = vmatprep.mubr.f32.mxu0 %v888
        %995 = vmatmul.mubr.f32.gmra.mrb[0].mxu0 %v887
        %v996 = vpop.f32.mrb[0].mxu0
        %v997 = vadd.f32 %v928, %v996
        %v998 = vpop.f32.mrb[0].mxu0
        %999 = vmatprep.mubr.f32.mxu0 %v890
        %1000 = vmatmul.mubr.f32.gmra.mrb[0].mxu0 %v889
        %v1001 = vpop.f32.mrb[0].mxu0
        %v1002 = vadd.f32 %v928, %v1001
        %v1003 = vpop.f32.mrb[0].mxu0
        %1004 = vdwg.mxu0
        %1005 = vst [vmem:[%s279] sm:$0xff] %v997
        %1006 = vst [vmem:[%s279 + $0x8] sm:$0xff] %v1002
        %s1007 = sand.u32 %s141, 1
        %s1008 = scalar_lea.sflag [#allocation4], %s1007
        %s1009 = sand.u32 %s141, 1
        %s1010 = smul.addr %s1009, 16
        %s1011 = scalar_lea.vmem [#allocation8], %s1010
        // Predicated region
        $region53: #{tpu_custom_call.1} parent=39 // pred_check
          %p1012 = pneg %p151
        $region54: #{tpu_custom_call.1} parent=39 // pred_check_branch
          %1014 = sbr.rel (%p1012) target = $region56
        $region55: #{tpu_custom_call.1} parent=39 // pred_region
          %s1015 = smul.u32 2, %s23
          %s1016 = ssub.s32 3, %s1015
          %p1017 = scmp.lt.s32.totalorder %s1016, 2
          %s1018 = scalar_select %p1017, %s1016, 2
          %s1019 = smul.u32 128, %s1018
          %s1021 = ssub.s32 256, %s1019
          %1022 = vsyncadd %s1008, %s1021
          %p1023 = scmp.ne.s32.totalorder 0, %s1019
          %s1024 = smul.addr %s1015, 128
          %s1025 = scalar_lea.hbm %s5, %s1024
          %s1026 = smul.u32 8, %s1018
          %s1027 = sshll.u32 %s1011, 4
          %s1028 = int_to_ptr.vmem [resolvable:$true] %s1027
          %s1029 = sshll.u32 %s1026, 4
          %1033 = dma.vmem_to_hbm [thread:$0]  (%p1023), %s1028, %s1029, %s1025, %s1008, 128, 128, 8
        $region56: #{tpu_custom_call.1} parent=39 // pred_fallthru
          _
      $region40: #{tpu_custom_call.1} parent=5 // pred_fallthru
        _
      %p1034 = scmp.le.s32.totalorder 2, %s18
      // Predicated region
      $region57: #{tpu_custom_call.1} parent=5 // pred_check
        %p1035 = pneg %p1034
      $region58: #{tpu_custom_call.1} parent=5 // pred_check_branch
        %1037 = sbr.rel (%p1035) target = $region60
      $region59: #{tpu_custom_call.1} parent=5 // pred_region
        %s1038 = ssub.s32 %s18, 2
        // Predicated region
        $region61: #{tpu_custom_call.1} parent=59 // pred_check
          %p1039 = pneg %p157
        $region62: #{tpu_custom_call.1} parent=59 // pred_check_branch
          %1041 = sbr.rel (%p1039) target = $region64
        $region63: #{tpu_custom_call.1} parent=59 // pred_region
          %s1042 = sand.u32 %s142, 1
          %s1043 = scalar_lea.sflag [#allocation4], %s1042
          %s1044 = sand.u32 %s142, 1
          %s1045 = smul.addr %s1044, 16
          %s1046 = scalar_lea.vmem [#allocation8], %s1045
          %1047 = dma.done %s1043, 256
        $region64: #{tpu_custom_call.1} parent=59 // pred_fallthru
          _
      $region60: #{tpu_custom_call.1} parent=5 // pred_fallthru
        _
    $region6: #{tpu_custom_call.1} parent=1 // loop_footer
      %s22 = sadd.s32 1, %s18
    $region7: #{tpu_custom_call.1} parent=1 // loop_footer_branch
      %17 = sbr.rel target = $region3
    $region8: #{tpu_custom_call.1} parent=1 // loop_exit
      _
    %1048 = vsyncpa [#allocation3], 1
    %s1049 = scalar_lea.sflag [#allocation3], 1
    %1050 = vsyncpa %s1049, 1
    %1051 = vsyncpa [#allocation6], 1
    %1052 = vsyncpa [#allocation4], 1
    %s1053 = scalar_lea.sflag [#allocation4], 1
    %1054 = vsyncpa %s1053, 1

</llo_original>
